<compile_context>
chip_gen: v6e
topology: v6e:2x2x1
jax: 0.10.0
libtpu: 0.0.40
codegen_flags: <defaults>
</compile_context>

<pallas_src>
import functools

import jax
import jax.numpy as jnp
from jax.experimental import pallas as pl
from jax.experimental.pallas import tpu as pltpu


# ---------------------------------------------------------------------------
# Pass 1: global average pool + excitation MLP -> per-(n, c) sigmoid gate.
# ---------------------------------------------------------------------------
def se_gate_kernel(x_ref, w1_ref, b1_ref, w2_ref, b2_ref, gate_ref, acc_ref,
                   *, inv_hw):
    t = pl.program_id(1)

    @pl.when(t == 0)
    def _init():
        acc_ref[...] = jnp.zeros_like(acc_ref)

    # x_ref: (1, C, thw).  Reduce over the lane (spatial) axis -> (1, C, 1).
    acc_ref[...] += jnp.sum(x_ref[...], axis=-1, keepdims=True)

    @pl.when(t == pl.num_programs(1) - 1)
    def _finalize():
        # mean over the *true* H*W (zero padding contributes nothing).
        mean = acc_ref[0] * inv_hw                                   # (C, 1)
        # 1x1 convs on a (N,C,1,1) tensor are per-sample matvecs: W @ mean + b.
        y1 = jnp.dot(w1_ref[...], mean,
                     preferred_element_type=jnp.float32) + b1_ref[...]
        y1 = jnp.maximum(y1, 0.0)                                    # ReLU
        y2 = jnp.dot(w2_ref[...], y1,
                     preferred_element_type=jnp.float32) + b2_ref[...]
        gate = 1.0 / (1.0 + jnp.exp(-y2))                            # sigmoid
        gate_ref[...] = gate[None]                                   # (1, C, 1)


# ---------------------------------------------------------------------------
# Pass 2: channel-wise rescale  out[n, c, :] = gate[n, c] * x[n, c, :].
# ---------------------------------------------------------------------------
def se_scale_kernel(x_ref, g_ref, o_ref):
    # x_ref: (1, C, thw), g_ref: (1, C, 1) -> lane broadcast.
    o_ref[...] = x_ref[...] * g_ref[...]


# ---------------------------------------------------------------------------
# Wrapper
# ---------------------------------------------------------------------------
def se_forward(x, w1, b1, w2, b2):
    """x: (N, C, H, W) f32.  w1/w2: (C, C, 1, 1), b1/b2: (C,).  Returns NCHW."""
    n, c, h, w = x.shape
    hw = h * w

    # Spatial tiling: lane-dense (multiple of 128) tiles, capped so VMEM use
    # per buffer stays small even for large C (sized against v7x's 64 MiB).
    lane = 128
    thw_target = 512
    hw_pad = pl.cdiv(hw, lane) * lane
    if hw_pad <= thw_target:
        thw = hw_pad
    else:
        thw = thw_target
        hw_pad = pl.cdiv(hw, thw) * thw
    n_t = hw_pad // thw

    x_flat = x.reshape(n, c, hw)
    if hw_pad != hw:
        x_flat = jnp.pad(x_flat, ((0, 0), (0, 0), (0, hw_pad - hw)))

    w1m = w1.reshape(c, c)           # (out, in)
    w2m = w2.reshape(c, c)
    b1c = b1.reshape(c, 1)
    b2c = b2.reshape(c, 1)

    # ---- Pass 1: pool + MLP -> gate (N, C, 1) ----
    gate = pl.pallas_call(
        functools.partial(se_gate_kernel, inv_hw=1.0 / float(hw)),
        out_shape=jax.ShapeDtypeStruct((n, c, 1), jnp.float32),
        grid_spec=pltpu.PrefetchScalarGridSpec(
            num_scalar_prefetch=0,
            grid=(n, n_t),
            in_specs=[
                pl.BlockSpec((1, c, thw), lambda i, t: (i, 0, t)),
                pl.BlockSpec((c, c), lambda i, t: (0, 0)),
                pl.BlockSpec((c, 1), lambda i, t: (0, 0)),
                pl.BlockSpec((c, c), lambda i, t: (0, 0)),
                pl.BlockSpec((c, 1), lambda i, t: (0, 0)),
            ],
            out_specs=pl.BlockSpec((1, c, 1), lambda i, t: (i, 0, 0)),
            scratch_shapes=[pltpu.VMEM((1, c, 1), jnp.float32)],
        ),
        compiler_params=pltpu.CompilerParams(
            dimension_semantics=("parallel", "arbitrary")),
    )(x_flat, w1m, b1c, w2m, b2c)

    # ---- Pass 2: broadcast-multiply (fully parallel, lane-dense stores) ----
    out_flat = pl.pallas_call(
        se_scale_kernel,
        out_shape=jax.ShapeDtypeStruct((n, c, hw_pad), jnp.float32),
        grid_spec=pltpu.PrefetchScalarGridSpec(
            num_scalar_prefetch=0,
            grid=(n, n_t),
            in_specs=[
                pl.BlockSpec((1, c, thw), lambda i, t: (i, 0, t)),
                pl.BlockSpec((1, c, 1), lambda i, t: (i, 0, 0)),
            ],
            out_specs=pl.BlockSpec((1, c, thw), lambda i, t: (i, 0, t)),
        ),
        compiler_params=pltpu.CompilerParams(
            dimension_semantics=("parallel", "parallel")),
    )(x_flat, gate)

    # Drop spatial padding (no-op when hw is already a multiple of the tile)
    # and restore (N, C, H, W).  No transpose needed -- layout never changed.
    return out_flat[:, :, :hw].reshape(n, c, h, w)


# ---------------------------------------------------------------------------
# Plain-JAX reference (matches the PyTorch SE forward).
# ---------------------------------------------------------------------------
def reference_forward(x, w1, b1, w2, b2):
    n, c, h, w = x.shape
    pooled = jnp.mean(x, axis=(2, 3))                       # (N, C)
    w1m = w1.reshape(c, c)
    w2m = w2.reshape(c, c)
    y1 = jnp.maximum(pooled @ w1m.T + b1, 0.0)
    y2 = y1 @ w2m.T + b2
    gate = jax.nn.sigmoid(y2)
    return x * gate[:, :, None, None]


if __name__ == "__main__":
    # SE(channels=4) on a (2, 4, 16, 16) input.
    N, C, H, W = 2, 4, 16, 16

    key = jax.random.PRNGKey(0)
    kx, k1, k2, k3, k4 = jax.random.split(key, 5)
    bound = 1.0 / (C ** 0.5)   # PyTorch Conv2d default init bound (fan_in = C)

    x = jax.random.normal(kx, (N, C, H, W), dtype=jnp.float32)
    w1 = jax.random.uniform(k1, (C, C, 1, 1), jnp.float32, -bound, bound)
    b1 = jax.random.uniform(k2, (C,), jnp.float32, -bound, bound)
    w2 = jax.random.uniform(k3, (C, C, 1, 1), jnp.float32, -bound, bound)
    b2 = jax.random.uniform(k4, (C,), jnp.float32, -bound, bound)

    out = jax.jit(se_forward)(x, w1, b1, w2, b2)
    out = jax.block_until_ready(out)

    ref = reference_forward(x, w1, b1, w2, b2)
    assert out.shape == (N, C, H, W)
    assert jnp.allclose(out, ref, atol=1e-5, rtol=1e-5), "mismatch vs reference"

    print("KERNEL_OK")
</pallas_src>

<mosaic_0001>
module attributes {stable_mosaic.version = 11 : i64} {
  func.func @se_scale_kernel(%arg0: i32, %arg1: i32, %arg2: memref<1x4x256xf32, #tpu.memory_space<vmem>>, %arg3: memref<1x4x1xf32, #tpu.memory_space<vmem>>, %arg4: memref<1x4x256xf32, #tpu.memory_space<vmem>>) attributes {dimension_semantics = [#tpu.dimension_semantics<parallel>, #tpu.dimension_semantics<parallel>], iteration_bounds = array<i64: 2, 1>, scalar_prefetch = 0 : i64, scratch_operands = 0 : i64, tpu.core_type = #tpu.core_type<tc>, window_params = [{transform_indices = @transform_0, window_bounds = array<i64: 1, 4, 256>}, {transform_indices = @transform_1, window_bounds = array<i64: 1, 4, 1>}, {transform_indices = @transform_2, window_bounds = array<i64: 1, 4, 256>}]} {
    %c0 = arith.constant 0 : index
    %c0_0 = arith.constant 0 : index
    %c0_1 = arith.constant 0 : index
    %0 = vector.load %arg2[%c0, %c0_0, %c0_1] : memref<1x4x256xf32, #tpu.memory_space<vmem>>, vector<1x4x256xf32>
    %c0_2 = arith.constant 0 : index
    %c0_3 = arith.constant 0 : index
    %c0_4 = arith.constant 0 : index
    %1 = vector.load %arg3[%c0_2, %c0_3, %c0_4] : memref<1x4x1xf32, #tpu.memory_space<vmem>>, vector<1x4x1xf32>
    %2 = vector.broadcast %1 : vector<1x4x1xf32> to vector<1x4x256xf32>
    %3 = arith.mulf %0, %2 : vector<1x4x256xf32>
    %c0_5 = arith.constant 0 : index
    %c0_6 = arith.constant 0 : index
    %c0_7 = arith.constant 0 : index
    %4 = vector.load %arg4[%c0_5, %c0_6, %c0_7] : memref<1x4x256xf32, #tpu.memory_space<vmem>>, vector<1x4x256xf32>
    tpu.vector_store %arg4[%c0_5, %c0_6, %c0_7], %3 {strides = array<i32>} : memref<1x4x256xf32, #tpu.memory_space<vmem>>, vector<1x4x256xf32>,
    return
  }
  func.func @transform_0(%arg0: i32, %arg1: i32) -> (i32, i32, i32) {
    %c0_i32 = arith.constant 0 : i32
    %c0_i32_0 = arith.constant 0 : i32
    return %arg0, %c0_i32, %arg1 : i32, i32, i32
  }
  func.func @transform_1(%arg0: i32, %arg1: i32) -> (i32, i32, i32) {
    %c0_i32 = arith.constant 0 : i32
    %c0_i32_0 = arith.constant 0 : i32
    %c0_i32_1 = arith.constant 0 : i32
    return %arg0, %c0_i32, %c0_i32_0 : i32, i32, i32
  }
  func.func @transform_2(%arg0: i32, %arg1: i32) -> (i32, i32, i32) {
    %c0_i32 = arith.constant 0 : i32
    %c0_i32_0 = arith.constant 0 : i32
    return %arg0, %c0_i32, %arg1 : i32, i32, i32
  }
}

module attributes {stable_mosaic.version = 11 : i64} {
  func.func @se_gate_kernel(%arg0: i32, %arg1: i32, %arg2: memref<1x4x256xf32, #tpu.memory_space<vmem>>, %arg3: memref<4x4xf32, #tpu.memory_space<vmem>>, %arg4: memref<4x1xf32, #tpu.memory_space<vmem>>, %arg5: memref<4x4xf32, #tpu.memory_space<vmem>>, %arg6: memref<4x1xf32, #tpu.memory_space<vmem>>, %arg7: memref<1x4x1xf32, #tpu.memory_space<vmem>>, %arg8: memref<1x4x1xf32, #tpu.memory_space<vmem>>) attributes {dimension_semantics = [#tpu.dimension_semantics<parallel>, #tpu.dimension_semantics<arbitrary>], iteration_bounds = array<i64: 2, 1>, scalar_prefetch = 0 : i64, scratch_operands = 1 : i64, tpu.core_type = #tpu.core_type<tc>, window_params = [{transform_indices = @transform_0, window_bounds = array<i64: 1, 4, 256>}, {pipeline_mode = #tpu.pipeline_mode<synchronous>, transform_indices = @transform_1, window_bounds = array<i64: 4, 4>}, {pipeline_mode = #tpu.pipeline_mode<synchronous>, transform_indices = @transform_2, window_bounds = array<i64: 4, 1>}, {pipeline_mode = #tpu.pipeline_mode<synchronous>, transform_indices = @transform_3, window_bounds = array<i64: 4, 4>}, {pipeline_mode = #tpu.pipeline_mode<synchronous>, transform_indices = @transform_4, window_bounds = array<i64: 4, 1>}, {transform_indices = @transform_5, window_bounds = array<i64: 1, 4, 1>}]} {
    %c0_i32 = arith.constant 0 : i32
    %0 = arith.cmpi eq, %arg1, %c0_i32 : i32
    %1 = arith.extui %0 : i1 to i32
    %c0_i32_0 = arith.constant 0 : i32
    %2 = arith.cmpi ne, %1, %c0_i32_0 : i32
    scf.if %2 {
      %cst_11 = arith.constant 0.000000e+00 : f32
      %12 = vector.broadcast %cst_11 : f32 to vector<1x4x1xf32>
      %c0_12 = arith.constant 0 : index
      %c0_13 = arith.constant 0 : index
      %c0_14 = arith.constant 0 : index
      %13 = vector.load %arg8[%c0_12, %c0_13, %c0_14] : memref<1x4x1xf32, #tpu.memory_space<vmem>>, vector<1x4x1xf32>
      tpu.vector_store %arg8[%c0_12, %c0_13, %c0_14], %12 {strides = array<i32>} : memref<1x4x1xf32, #tpu.memory_space<vmem>>, vector<1x4x1xf32>,
    } else {
    }
    %c0 = arith.constant 0 : index
    %c0_1 = arith.constant 0 : index
    %c0_2 = arith.constant 0 : index
    %3 = vector.load %arg8[%c0, %c0_1, %c0_2] : memref<1x4x1xf32, #tpu.memory_space<vmem>>, vector<1x4x1xf32>
    %c0_3 = arith.constant 0 : index
    %c0_4 = arith.constant 0 : index
    %c0_5 = arith.constant 0 : index
    %4 = vector.load %arg2[%c0_3, %c0_4, %c0_5] : memref<1x4x256xf32, #tpu.memory_space<vmem>>, vector<1x4x256xf32>
    %cst = arith.constant dense<0.000000e+00> : vector<1x4xf32>
    %5 = vector.multi_reduction <add>, %4, %cst [2] : vector<1x4x256xf32> to vector<1x4xf32>
    %6 = vector.shape_cast %5 : vector<1x4xf32> to vector<1x4x1xf32>
    %7 = arith.addf %3, %6 : vector<1x4x1xf32>
    %c0_6 = arith.constant 0 : index
    %c0_7 = arith.constant 0 : index
    %c0_8 = arith.constant 0 : index
    %8 = vector.load %arg8[%c0_6, %c0_7, %c0_8] : memref<1x4x1xf32, #tpu.memory_space<vmem>>, vector<1x4x1xf32>
    tpu.vector_store %arg8[%c0_6, %c0_7, %c0_8], %7 {strides = array<i32>} : memref<1x4x1xf32, #tpu.memory_space<vmem>>, vector<1x4x1xf32>,
    %c0_i32_9 = arith.constant 0 : i32
    %9 = arith.cmpi eq, %arg1, %c0_i32_9 : i32
    %10 = arith.extui %9 : i1 to i32
    %c0_i32_10 = arith.constant 0 : i32
    %11 = arith.cmpi ne, %10, %c0_i32_10 : i32
    scf.if %11 {
      %c0_11 = arith.constant 0 : index
      %c0_12 = arith.constant 0 : index
      %c0_13 = arith.constant 0 : index
      %12 = vector.load %arg8[%c0_11, %c0_12, %c0_13] : memref<1x4x1xf32, #tpu.memory_space<vmem>>, vector<1x4x1xf32>
      %13 = vector.shape_cast %12 : vector<1x4x1xf32> to vector<4x1xf32>
      %cst_14 = arith.constant 3.906250e-03 : f32
      %14 = vector.broadcast %cst_14 : f32 to vector<4x1xf32>
      %15 = arith.mulf %13, %14 : vector<4x1xf32>
      %c0_15 = arith.constant 0 : index
      %c0_16 = arith.constant 0 : index
      %16 = vector.load %arg3[%c0_15, %c0_16] : memref<4x4xf32, #tpu.memory_space<vmem>>, vector<4x4xf32>
      %cst_17 = arith.constant dense<0.000000e+00> : vector<4x1xf32>
      %17 = tpu.matmul %16, %15, %cst_17 {dimension_numbers = #tpu.dot_dimension_numbers<[1], [0], [0], [1], [0, 0, 1, 1], [], []>} : vector<4x4xf32>, vector<4x1xf32>, vector<4x1xf32> -> vector<4x1xf32>
      %c0_18 = arith.constant 0 : index
      %c0_19 = arith.constant 0 : index
      %18 = vector.load %arg4[%c0_18, %c0_19] : memref<4x1xf32, #tpu.memory_space<vmem>>, vector<4x1xf32>
      %19 = arith.addf %17, %18 : vector<4x1xf32>
      %cst_20 = arith.constant 0.000000e+00 : f32
      %20 = vector.broadcast %cst_20 : f32 to vector<4x1xf32>
      %21 = arith.maximumf %19, %20 : vector<4x1xf32>
      %c0_21 = arith.constant 0 : index
      %c0_22 = arith.constant 0 : index
      %22 = vector.load %arg5[%c0_21, %c0_22] : memref<4x4xf32, #tpu.memory_space<vmem>>, vector<4x4xf32>
      %cst_23 = arith.constant dense<0.000000e+00> : vector<4x1xf32>
      %23 = tpu.matmul %22, %21, %cst_23 {dimension_numbers = #tpu.dot_dimension_numbers<[1], [0], [0], [1], [0, 0, 1, 1], [], []>} : vector<4x4xf32>, vector<4x1xf32>, vector<4x1xf32> -> vector<4x1xf32>
      %c0_24 = arith.constant 0 : index
      %c0_25 = arith.constant 0 : index
      %24 = vector.load %arg6[%c0_24, %c0_25] : memref<4x1xf32, #tpu.memory_space<vmem>>, vector<4x1xf32>
      %25 = arith.addf %23, %24 : vector<4x1xf32>
      %cst_26 = arith.constant 0.000000e+00 : f32
      %26 = vector.broadcast %cst_26 : f32 to vector<4x1xf32>
      %27 = arith.subf %26, %25 : vector<4x1xf32>
      %28 = math.exp %27 : vector<4x1xf32>
      %cst_27 = arith.constant 1.000000e+00 : f32
      %29 = vector.broadcast %cst_27 : f32 to vector<4x1xf32>
      %30 = arith.addf %29, %28 : vector<4x1xf32>
      %cst_28 = arith.constant 1.000000e+00 : f32
      %31 = vector.broadcast %cst_28 : f32 to vector<4x1xf32>
      %32 = arith.divf %31, %30 : vector<4x1xf32>
      %33 = vector.shape_cast %32 : vector<4x1xf32> to vector<1x4x1xf32>
      %c0_29 = arith.constant 0 : index
      %c0_30 = arith.constant 0 : index
      %c0_31 = arith.constant 0 : index
      %34 = vector.load %arg7[%c0_29, %c0_30, %c0_31] : memref<1x4x1xf32, #tpu.memory_space<vmem>>, vector<1x4x1xf32>
      tpu.vector_store %arg7[%c0_29, %c0_30, %c0_31], %33 {strides = array<i32>} : memref<1x4x1xf32, #tpu.memory_space<vmem>>, vector<1x4x1xf32>,
    } else {
    }
    return
  }
  func.func @transform_0(%arg0: i32, %arg1: i32) -> (i32, i32, i32) {
    %c0_i32 = arith.constant 0 : i32
    %c0_i32_0 = arith.constant 0 : i32
    return %arg0, %c0_i32, %arg1 : i32, i32, i32
  }
  func.func @transform_1(%arg0: i32, %arg1: i32) -> (i32, i32) {
    %c0_i32 = arith.constant 0 : i32
    %c0_i32_0 = arith.constant 0 : i32
    %c0_i32_1 = arith.constant 0 : i32
    return %c0_i32, %c0_i32_0 : i32, i32
  }
  func.func @transform_2(%arg0: i32, %arg1: i32) -> (i32, i32) {
    %c0_i32 = arith.constant 0 : i32
    %c0_i32_0 = arith.constant 0 : i32
    %c0_i32_1 = arith.constant 0 : i32
    return %c0_i32, %c0_i32_0 : i32, i32
  }
  func.func @transform_3(%arg0: i32, %arg1: i32) -> (i32, i32) {
    %c0_i32 = arith.constant 0 : i32
    %c0_i32_0 = arith.constant 0 : i32
    %c0_i32_1 = arith.constant 0 : i32
    return %c0_i32, %c0_i32_0 : i32, i32
  }
  func.func @transform_4(%arg0: i32, %arg1: i32) -> (i32, i32) {
    %c0_i32 = arith.constant 0 : i32
    %c0_i32_0 = arith.constant 0 : i32
    %c0_i32_1 = arith.constant 0 : i32
    return %c0_i32, %c0_i32_0 : i32, i32
  }
  func.func @transform_5(%arg0: i32, %arg1: i32) -> (i32, i32, i32) {
    %c0_i32 = arith.constant 0 : i32
    %c0_i32_0 = arith.constant 0 : i32
    %c0_i32_1 = arith.constant 0 : i32
    return %arg0, %c0_i32, %c0_i32_0 : i32, i32, i32
  }
}

</mosaic_0001>

<llo_original>
// kernel: se_forward.3
$region0: #{se_forward.3}
  #allocation0 [shape = 'u32[]', space=smem, size = 0x4, offset = 0x4, fixed_abs, tag = 'smem constant byte address 0x4 - core index']
  #allocation1 [shape = 'u32[144,128]{1,0:T(1,128)}', space=vmem, size = 0x12000, scoped, tag = 'internal scratch']
  %s0 = inlined_call_operand.vmem [shape: f32[2,4,256], index: 0, kind: input, shape index: {}]
  %s1 = inlined_call_operand.vmem [shape: f32[2,4,1], index: 1, kind: input, shape index: {}]
  %s2 = inlined_call_operand.vmem [shape: f32[2,4,256], index: 2, kind: output, shape index: {}]
  %s3 = sld [smem:[#allocation0]]
  $region41: #{se_forward.3} parent=0
    _
  %s5 = ssub.s32 1, %s3
  %s6 = scalar_select 0, %s5, %s3
  loop: start=0, step=1, limit=4
  $region2: #{se_forward.3} parent=0 // loop_pre_header
    _
  $region3: #{se_forward.3} parent=0 // loop_header
    %s8 = sphi 0, %s12
    %p9 = scmp.ge.s32.totalorder %s8, 4
    %s15 = sphi 0, %s27
    %s16 = sphi 0, %s23
    %s17 = sphi 0, %s15
    %s18 = sphi 0, %s16
    %s19 = sphi 0, %s17
    %s20 = sphi 0, %s18
    %s32 = sphi 0, %s34
    %s35 = sphi 0, %s32
    %s36 = sphi 0, %s35
    %s52 = sphi 0, %s36
    %s58 = sphi 0, %s60
    %s61 = sphi 0, %s58
    %s62 = sphi 0, %s61
    %s78 = sphi 0, %s62
    %s86 = sphi 0, %s88
    %s89 = sphi 0, %s86
    %s90 = sphi 0, %s89
    %s106 = sphi 0, %s90
  $region4: #{se_forward.3} parent=0 // loop_header_branch
    %11 = sbr.rel (%p9) target = $region8
  $region5: #{se_forward.3} parent=0 // loop_body
    %s13 = ssub.s32 %s8, 1
    %s14 = ssub.s32 %s8, 2
    %s21 = sadd.s32 1, %s16
    %p22 = scmp.ge.s32.totalorder %s21, 1
    %s23 = scalar_select %p22, 0, %s21
    %s24 = sadd.s32 1, %s15
    %s25 = scalar_select %p22, %s24, %s15
    %p26 = scmp.ge.s32.totalorder %s25, 2
    %s27 = scalar_select %p26, 0, %s25
    %s28 = ssub.s32 %s15, %s27
    %s29 = ssub.s32 %s16, %s23
    %s30 = sor.u32 %s28, %s29
    %p31 = scmp.eq.s32.totalorder %s30, 0
    %s33 = sadd.s32 %s32, 1
    %s34 = scalar_select %p31, %s32, %s33
    %p37 = pneg %p31
    %p38 = scmp.eq.s32.totalorder %s8, 1
    %p39 = por %p37, %p38
    %p40 = scmp.ne.s32.totalorder %s32, %s35
    %p41 = scmp.eq.s32.totalorder %s8, 0
    %p42 = por %p40, %p41
    %p43 = scmp.ne.s32.totalorder %s32, %s35
    %p44 = scmp.eq.s32.totalorder %s13, 1
    %p45 = por %p43, %p44
    %p46 = scmp.ne.s32.totalorder %s35, %s36
    %p47 = scmp.eq.s32.totalorder %s13, 0
    %p48 = por %p46, %p47
    %p49 = scmp.ne.s32.totalorder %s35, %s36
    %p50 = scmp.eq.s32.totalorder %s14, 1
    %p51 = por %p49, %p50
    %p53 = scmp.ne.s32.totalorder %s36, %s52
    %p54 = scmp.eq.s32.totalorder %s14, 0
    %p55 = por %p53, %p54
    %s56 = ssub.s32 %s15, %s27
    %p57 = scmp.eq.s32.totalorder %s56, 0
    %s59 = sadd.s32 %s58, 1
    %s60 = scalar_select %p57, %s58, %s59
    %p63 = pneg %p57
    %p64 = scmp.eq.s32.totalorder %s8, 1
    %p65 = por %p63, %p64
    %p66 = scmp.ne.s32.totalorder %s58, %s61
    %p67 = scmp.eq.s32.totalorder %s8, 0
    %p68 = por %p66, %p67
    %p69 = scmp.ne.s32.totalorder %s58, %s61
    %p70 = scmp.eq.s32.totalorder %s13, 1
    %p71 = por %p69, %p70
    %p72 = scmp.ne.s32.totalorder %s61, %s62
    %p73 = scmp.eq.s32.totalorder %s13, 0
    %p74 = por %p72, %p73
    %p75 = scmp.ne.s32.totalorder %s61, %s62
    %p76 = scmp.eq.s32.totalorder %s14, 1
    %p77 = por %p75, %p76
    %p79 = scmp.ne.s32.totalorder %s62, %s78
    %p80 = scmp.eq.s32.totalorder %s14, 0
    %p81 = por %p79, %p80
    %s82 = ssub.s32 %s15, %s27
    %s83 = ssub.s32 %s16, %s23
    %s84 = sor.u32 %s82, %s83
    %p85 = scmp.eq.s32.totalorder %s84, 0
    %s87 = sadd.s32 %s86, 1
    %s88 = scalar_select %p85, %s86, %s87
    %p91 = pneg %p85
    %p92 = scmp.eq.s32.totalorder %s8, 1
    %p93 = por %p91, %p92
    %p94 = scmp.ne.s32.totalorder %s86, %s89
    %p95 = scmp.eq.s32.totalorder %s8, 0
    %p96 = por %p94, %p95
    %p97 = scmp.ne.s32.totalorder %s86, %s89
    %p98 = scmp.eq.s32.totalorder %s13, 1
    %p99 = por %p97, %p98
    %p100 = scmp.ne.s32.totalorder %s89, %s90
    %p101 = scmp.eq.s32.totalorder %s13, 0
    %p102 = por %p100, %p101
    %p103 = scmp.ne.s32.totalorder %s89, %s90
    %p104 = scmp.eq.s32.totalorder %s14, 1
    %p105 = por %p103, %p104
    %p107 = scmp.ne.s32.totalorder %s90, %s106
    %p108 = scmp.eq.s32.totalorder %s14, 0
    %p109 = por %p107, %p108
    %p110 = scmp.le.s32.totalorder 1, %s8
    %p111 = scmp.lt.s32.totalorder %s8, 3
    %p112 = pnand %p110, %p111
    %p113 = pneg %p112
    // Predicated region
    $region9: #{se_forward.3} parent=5 // pred_check
      _
    $region10: #{se_forward.3} parent=5 // pred_check_branch
      %115 = sbr.rel (%p112) target = $region12
    $region11: #{se_forward.3} parent=5 // pred_region
      %s116 = ssub.s32 %s8, 1
    $region12: #{se_forward.3} parent=5 // pred_fallthru
      _
    %p117 = scmp.lt.s32.totalorder %s8, 2
    // Predicated region
    $region13: #{se_forward.3} parent=5 // pred_check
      %p118 = pneg %p117
    $region14: #{se_forward.3} parent=5 // pred_check_branch
      %120 = sbr.rel (%p118) target = $region16
    $region15: #{se_forward.3} parent=5 // pred_region
      // Predicated region
      $region17: #{se_forward.3} parent=15 // pred_check
        %p121 = pneg %p42
      $region18: #{se_forward.3} parent=15 // pred_check_branch
        %123 = sbr.rel (%p121) target = $region20
      $region19: #{se_forward.3} parent=15 // pred_region
        %s124 = smul.u32 2, %s16
        %p125 = scmp.lt.s32.totalorder %s15, 1
        %s126 = scalar_select %p125, %s15, 1
        %p127 = scmp.lt.s32.totalorder %s124, 1
        %s128 = scalar_select %p127, %s124, 1
        %s129 = smul.addr %s126, 2
        %s130 = sadd.s32 %s128, %s129
        %s131 = smul.addr %s130, 4
        %s132 = scalar_lea.vmem %s0, %s131
        %s133 = smul.u32 2, %s16
      $region20: #{se_forward.3} parent=15 // pred_fallthru
        _
      // Predicated region
      $region21: #{se_forward.3} parent=15 // pred_check
        %p134 = pneg %p68
      $region22: #{se_forward.3} parent=15 // pred_check_branch
        %136 = sbr.rel (%p134) target = $region24
      $region23: #{se_forward.3} parent=15 // pred_region
        %p137 = scmp.lt.s32.totalorder %s15, 1
        %s138 = scalar_select %p137, %s15, 1
        %s139 = smul.addr %s138, 4
        %s140 = scalar_lea.vmem %s1, %s139
      $region24: #{se_forward.3} parent=15 // pred_fallthru
        _
    $region16: #{se_forward.3} parent=5 // pred_fallthru
      _
    %p141 = scmp.le.s32.totalorder 1, %s8
    %p142 = scmp.lt.s32.totalorder %s8, 3
    %p143 = pnand %p141, %p142
    %p144 = pneg %p143
    // Predicated region
    $region25: #{se_forward.3} parent=5 // pred_check
      _
    $region26: #{se_forward.3} parent=5 // pred_check_branch
      %146 = sbr.rel (%p143) target = $region28
    $region27: #{se_forward.3} parent=5 // pred_region
      %s147 = ssub.s32 %s8, 1
      %s148 = smul.u32 2, %s18
      %p149 = scmp.lt.s32.totalorder %s17, 1
      %s150 = scalar_select %p149, %s17, 1
      %p151 = scmp.lt.s32.totalorder %s148, 1
      %s152 = scalar_select %p151, %s148, 1
      %s153 = smul.addr %s150, 2
      %s154 = sadd.s32 %s152, %s153
      %s155 = smul.addr %s154, 4
      %s156 = scalar_lea.vmem %s0, %s155
      %p157 = pneg %p48
      %p158 = pneg %p45
      %p159 = scmp.lt.s32.totalorder %s17, 1
      %s160 = scalar_select %p159, %s17, 1
      %s161 = smul.addr %s160, 4
      %s162 = scalar_lea.vmem %s1, %s161
      %p163 = pneg %p74
      %p164 = pneg %p71
      %p165 = pneg %p102
      %p166 = pneg %p99
      %s167 = smul.u32 2, %s18
      %p168 = scmp.lt.s32.totalorder %s17, 1
      %s169 = scalar_select %p168, %s17, 1
      %p170 = scmp.lt.s32.totalorder %s167, 1
      %s171 = scalar_select %p170, %s167, 1
      %s172 = smul.addr %s169, 2
      %s173 = sadd.s32 %s171, %s172
      %s174 = smul.addr %s173, 4
      %s175 = scalar_lea.vmem %s2, %s174
      %s176 = smul.u32 2, %s18
      %p177 = scmp.lt.s32.totalorder %s17, 1
      %s178 = scalar_select %p177, %s17, 1
      %p179 = scmp.lt.s32.totalorder %s176, 1
      %s180 = scalar_select %p179, %s176, 1
      %s181 = smul.addr %s178, 2
      %s182 = sadd.s32 %s180, %s181
      %s183 = smul.addr %s182, 4
      %s184 = scalar_lea.vmem %s0, %s183
      %s185 = smul.u32 2, %s18
      %p186 = scmp.lt.s32.totalorder %s17, 1
      %s187 = scalar_select %p186, %s17, 1
      %s188 = smul.addr %s187, 4
      %s189 = scalar_lea.vmem %s1, %s188
      %s190 = smul.u32 2, %s18
      %p191 = scmp.lt.s32.totalorder %s17, 1
      %s192 = scalar_select %p191, %s17, 1
      %p193 = scmp.lt.s32.totalorder %s190, 1
      %s194 = scalar_select %p193, %s190, 1
      %s195 = smul.addr %s192, 2
      %s196 = sadd.s32 %s194, %s195
      %s197 = smul.addr %s196, 4
      %s198 = scalar_lea.vmem %s2, %s197
      %s199 = smul.u32 2, %s18
      %v200 = vld [vmem:[%s184] sm:$0xff]
      %v201 = vld [vmem:[%s189] sm:$0xf]
      %203 = vset.pattern.permute.xlu0 0
      %204 = vperm.xlu0 %203, %v201
      %v205 = vpop.permute.xlu0 %204
      %v207 = vunpack.c.l.s4 839922192
      %v208 = vunpack.c.0.s8 %v207
      %v209 = vlaneseq
      %v210 = vshrl.u32 %v209, 7
      %v211 = vsub.s32 %v208, %v210
      %v212 = vrot.slane %v205, %v211
      %v214 = vmul.f32 %v200, %v212
      %215 = vst [vmem:[%s198] sm:$0xff] %v214
      %s216 = smul.u32 2, %s18
      %p217 = scmp.lt.s32.totalorder %s17, 1
      %s218 = scalar_select %p217, %s17, 1
      %p219 = scmp.lt.s32.totalorder %s216, 1
      %s220 = scalar_select %p219, %s216, 1
      %s221 = smul.addr %s218, 2
      %s222 = sadd.s32 %s220, %s221
      %s223 = smul.addr %s222, 4
      %s224 = scalar_lea.vmem %s2, %s223
      // Predicated region
      $region29: #{se_forward.3} parent=27 // pred_check
        %p225 = pneg %p99
      $region30: #{se_forward.3} parent=27 // pred_check_branch
        %227 = sbr.rel (%p225) target = $region32
      $region31: #{se_forward.3} parent=27 // pred_region
        %s228 = smul.u32 2, %s18
      $region32: #{se_forward.3} parent=27 // pred_fallthru
        _
    $region28: #{se_forward.3} parent=5 // pred_fallthru
      _
    %p229 = scmp.le.s32.totalorder 2, %s8
    // Predicated region
    $region33: #{se_forward.3} parent=5 // pred_check
      %p230 = pneg %p229
    $region34: #{se_forward.3} parent=5 // pred_check_branch
      %232 = sbr.rel (%p230) target = $region36
    $region35: #{se_forward.3} parent=5 // pred_region
      %s233 = ssub.s32 %s8, 2
      // Predicated region
      $region37: #{se_forward.3} parent=35 // pred_check
        %p234 = pneg %p105
      $region38: #{se_forward.3} parent=35 // pred_check_branch
        %236 = sbr.rel (%p234) target = $region40
      $region39: #{se_forward.3} parent=35 // pred_region
        %s237 = smul.u32 2, %s20
        %p238 = scmp.lt.s32.totalorder %s19, 1
        %s239 = scalar_select %p238, %s19, 1
        %p240 = scmp.lt.s32.totalorder %s237, 1
        %s241 = scalar_select %p240, %s237, 1
        %s242 = smul.addr %s239, 2
        %s243 = sadd.s32 %s241, %s242
        %s244 = smul.addr %s243, 4
        %s245 = scalar_lea.vmem %s2, %s244
      $region40: #{se_forward.3} parent=35 // pred_fallthru
        _
    $region36: #{se_forward.3} parent=5 // pred_fallthru
      _
  $region6: #{se_forward.3} parent=0 // loop_footer
    %s12 = sadd.s32 1, %s8
  $region7: #{se_forward.3} parent=0 // loop_footer_branch
    %7 = sbr.rel target = $region3
  $region8: #{se_forward.3} parent=0 // loop_exit
    _

// kernel: se_forward.2
$region0: #{se_forward.2}
  #allocation0 [shape = 'u32[]', space=smem, size = 0x4, offset = 0x4, fixed_abs, tag = 'smem constant byte address 0x4 - core index']
  #allocation1 [shape = 'u32[144,128]{1,0:T(1,128)}', space=vmem, size = 0x12000, scoped, tag = 'internal scratch']
  #allocation2 [shape = 'f32[1,4,1]{2,1,0:T(4,128)}', space=vmem, size = 0x800, scoped, tag = 'scratch operand']
  %s0 = inlined_call_operand.vmem [shape: f32[2,4,256], index: 0, kind: input, shape index: {}]
  %s1 = inlined_call_operand.vmem [shape: f32[4,4], index: 1, kind: input, shape index: {}]
  %s2 = inlined_call_operand.vmem [shape: f32[4,1], index: 2, kind: input, shape index: {}]
  %s3 = inlined_call_operand.vmem [shape: f32[4,4], index: 3, kind: input, shape index: {}]
  %s4 = inlined_call_operand.vmem [shape: f32[4,1], index: 4, kind: input, shape index: {}]
  %s5 = inlined_call_operand.vmem [shape: f32[2,4,1], index: 5, kind: output, shape index: {}]
  %s6 = sld [smem:[#allocation0]]
  $region61: #{se_forward.2} parent=0
    _
  %s8 = ssub.s32 1, %s6
  %s9 = scalar_select 0, %s8, %s6
  loop: start=0, step=1, limit=4
  $region2: #{se_forward.2} parent=0 // loop_pre_header
    _
  $region3: #{se_forward.2} parent=0 // loop_header
    %s11 = sphi 0, %s15
    %p12 = scmp.ge.s32.totalorder %s11, 4
    %s18 = sphi 0, %s30
    %s19 = sphi 0, %s26
    %s20 = sphi 0, %s18
    %s21 = sphi 0, %s19
    %s22 = sphi 0, %s20
    %s23 = sphi 0, %s21
    %s35 = sphi 0, %s37
    %s38 = sphi 0, %s35
    %s39 = sphi 0, %s38
    %s55 = sphi 0, %s39
    %s59 = sphi 0, %s59
    %s61 = sphi 0, %s59
    %s62 = sphi 0, %s61
    %s76 = sphi 0, %s62
    %s80 = sphi 0, %s80
    %s82 = sphi 0, %s80
    %s83 = sphi 0, %s82
    %s97 = sphi 0, %s83
    %s101 = sphi 0, %s101
    %s103 = sphi 0, %s101
    %s104 = sphi 0, %s103
    %s118 = sphi 0, %s104
    %s122 = sphi 0, %s122
    %s124 = sphi 0, %s122
    %s125 = sphi 0, %s124
    %s139 = sphi 0, %s125
    %s145 = sphi 0, %s147
    %s148 = sphi 0, %s145
    %s149 = sphi 0, %s148
    %s165 = sphi 0, %s149
  $region4: #{se_forward.2} parent=0 // loop_header_branch
    %14 = sbr.rel (%p12) target = $region8
  $region5: #{se_forward.2} parent=0 // loop_body
    %s16 = ssub.s32 %s11, 1
    %s17 = ssub.s32 %s11, 2
    %s24 = sadd.s32 1, %s19
    %p25 = scmp.ge.s32.totalorder %s24, 1
    %s26 = scalar_select %p25, 0, %s24
    %s27 = sadd.s32 1, %s18
    %s28 = scalar_select %p25, %s27, %s18
    %p29 = scmp.ge.s32.totalorder %s28, 2
    %s30 = scalar_select %p29, 0, %s28
    %s31 = ssub.s32 %s18, %s30
    %s32 = ssub.s32 %s19, %s26
    %s33 = sor.u32 %s31, %s32
    %p34 = scmp.eq.s32.totalorder %s33, 0
    %s36 = sadd.s32 %s35, 1
    %s37 = scalar_select %p34, %s35, %s36
    %p40 = pneg %p34
    %p41 = scmp.eq.s32.totalorder %s11, 1
    %p42 = por %p40, %p41
    %p43 = scmp.ne.s32.totalorder %s35, %s38
    %p44 = scmp.eq.s32.totalorder %s11, 0
    %p45 = por %p43, %p44
    %p46 = scmp.ne.s32.totalorder %s35, %s38
    %p47 = scmp.eq.s32.totalorder %s16, 1
    %p48 = por %p46, %p47
    %p49 = scmp.ne.s32.totalorder %s38, %s39
    %p50 = scmp.eq.s32.totalorder %s16, 0
    %p51 = por %p49, %p50
    %p52 = scmp.ne.s32.totalorder %s38, %s39
    %p53 = scmp.eq.s32.totalorder %s17, 1
    %p54 = por %p52, %p53
    %p56 = scmp.ne.s32.totalorder %s39, %s55
    %p57 = scmp.eq.s32.totalorder %s17, 0
    %p58 = por %p56, %p57
    %s60 = sadd.s32 %s59, 1
    %p63 = scmp.eq.s32.totalorder %s11, 1
    %p64 = scmp.ne.s32.totalorder %s59, %s61
    %p65 = scmp.eq.s32.totalorder %s11, 0
    %p66 = por %p64, %p65
    %p67 = scmp.ne.s32.totalorder %s59, %s61
    %p68 = scmp.eq.s32.totalorder %s16, 1
    %p69 = por %p67, %p68
    %p70 = scmp.ne.s32.totalorder %s61, %s62
    %p71 = scmp.eq.s32.totalorder %s16, 0
    %p72 = por %p70, %p71
    %p73 = scmp.ne.s32.totalorder %s61, %s62
    %p74 = scmp.eq.s32.totalorder %s17, 1
    %p75 = por %p73, %p74
    %p77 = scmp.ne.s32.totalorder %s62, %s76
    %p78 = scmp.eq.s32.totalorder %s17, 0
    %p79 = por %p77, %p78
    %s81 = sadd.s32 %s80, 1
    %p84 = scmp.eq.s32.totalorder %s11, 1
    %p85 = scmp.ne.s32.totalorder %s80, %s82
    %p86 = scmp.eq.s32.totalorder %s11, 0
    %p87 = por %p85, %p86
    %p88 = scmp.ne.s32.totalorder %s80, %s82
    %p89 = scmp.eq.s32.totalorder %s16, 1
    %p90 = por %p88, %p89
    %p91 = scmp.ne.s32.totalorder %s82, %s83
    %p92 = scmp.eq.s32.totalorder %s16, 0
    %p93 = por %p91, %p92
    %p94 = scmp.ne.s32.totalorder %s82, %s83
    %p95 = scmp.eq.s32.totalorder %s17, 1
    %p96 = por %p94, %p95
    %p98 = scmp.ne.s32.totalorder %s83, %s97
    %p99 = scmp.eq.s32.totalorder %s17, 0
    %p100 = por %p98, %p99
    %s102 = sadd.s32 %s101, 1
    %p105 = scmp.eq.s32.totalorder %s11, 1
    %p106 = scmp.ne.s32.totalorder %s101, %s103
    %p107 = scmp.eq.s32.totalorder %s11, 0
    %p108 = por %p106, %p107
    %p109 = scmp.ne.s32.totalorder %s101, %s103
    %p110 = scmp.eq.s32.totalorder %s16, 1
    %p111 = por %p109, %p110
    %p112 = scmp.ne.s32.totalorder %s103, %s104
    %p113 = scmp.eq.s32.totalorder %s16, 0
    %p114 = por %p112, %p113
    %p115 = scmp.ne.s32.totalorder %s103, %s104
    %p116 = scmp.eq.s32.totalorder %s17, 1
    %p117 = por %p115, %p116
    %p119 = scmp.ne.s32.totalorder %s104, %s118
    %p120 = scmp.eq.s32.totalorder %s17, 0
    %p121 = por %p119, %p120
    %s123 = sadd.s32 %s122, 1
    %p126 = scmp.eq.s32.totalorder %s11, 1
    %p127 = scmp.ne.s32.totalorder %s122, %s124
    %p128 = scmp.eq.s32.totalorder %s11, 0
    %p129 = por %p127, %p128
    %p130 = scmp.ne.s32.totalorder %s122, %s124
    %p131 = scmp.eq.s32.totalorder %s16, 1
    %p132 = por %p130, %p131
    %p133 = scmp.ne.s32.totalorder %s124, %s125
    %p134 = scmp.eq.s32.totalorder %s16, 0
    %p135 = por %p133, %p134
    %p136 = scmp.ne.s32.totalorder %s124, %s125
    %p137 = scmp.eq.s32.totalorder %s17, 1
    %p138 = por %p136, %p137
    %p140 = scmp.ne.s32.totalorder %s125, %s139
    %p141 = scmp.eq.s32.totalorder %s17, 0
    %p142 = por %p140, %p141
    %s143 = ssub.s32 %s18, %s30
    %p144 = scmp.eq.s32.totalorder %s143, 0
    %s146 = sadd.s32 %s145, 1
    %s147 = scalar_select %p144, %s145, %s146
    %p150 = pneg %p144
    %p151 = scmp.eq.s32.totalorder %s11, 1
    %p152 = por %p150, %p151
    %p153 = scmp.ne.s32.totalorder %s145, %s148
    %p154 = scmp.eq.s32.totalorder %s11, 0
    %p155 = por %p153, %p154
    %p156 = scmp.ne.s32.totalorder %s145, %s148
    %p157 = scmp.eq.s32.totalorder %s16, 1
    %p158 = por %p156, %p157
    %p159 = scmp.ne.s32.totalorder %s148, %s149
    %p160 = scmp.eq.s32.totalorder %s16, 0
    %p161 = por %p159, %p160
    %p162 = scmp.ne.s32.totalorder %s148, %s149
    %p163 = scmp.eq.s32.totalorder %s17, 1
    %p164 = por %p162, %p163
    %p166 = scmp.ne.s32.totalorder %s149, %s165
    %p167 = scmp.eq.s32.totalorder %s17, 0
    %p168 = por %p166, %p167
    %p169 = scmp.le.s32.totalorder 1, %s11
    %p170 = scmp.lt.s32.totalorder %s11, 3
    %p171 = pnand %p169, %p170
    %p172 = pneg %p171
    // Predicated region
    $region9: #{se_forward.2} parent=5 // pred_check
      _
    $region10: #{se_forward.2} parent=5 // pred_check_branch
      %174 = sbr.rel (%p171) target = $region12
    $region11: #{se_forward.2} parent=5 // pred_region
      %s175 = ssub.s32 %s11, 1
      // Predicated region
      $region13: #{se_forward.2} parent=11 // pred_check
        %p176 = pneg %p72
      $region14: #{se_forward.2} parent=11 // pred_check_branch
        %178 = sbr.rel (%p176) target = $region16
      $region15: #{se_forward.2} parent=11 // pred_region
        _
      $region16: #{se_forward.2} parent=11 // pred_fallthru
        _
      // Predicated region
      $region17: #{se_forward.2} parent=11 // pred_check
        %p179 = pneg %p93
      $region18: #{se_forward.2} parent=11 // pred_check_branch
        %181 = sbr.rel (%p179) target = $region20
      $region19: #{se_forward.2} parent=11 // pred_region
        _
      $region20: #{se_forward.2} parent=11 // pred_fallthru
        _
      // Predicated region
      $region21: #{se_forward.2} parent=11 // pred_check
        %p182 = pneg %p114
      $region22: #{se_forward.2} parent=11 // pred_check_branch
        %184 = sbr.rel (%p182) target = $region24
      $region23: #{se_forward.2} parent=11 // pred_region
        _
      $region24: #{se_forward.2} parent=11 // pred_fallthru
        _
      // Predicated region
      $region25: #{se_forward.2} parent=11 // pred_check
        %p185 = pneg %p135
      $region26: #{se_forward.2} parent=11 // pred_check_branch
        %187 = sbr.rel (%p185) target = $region28
      $region27: #{se_forward.2} parent=11 // pred_region
        _
      $region28: #{se_forward.2} parent=11 // pred_fallthru
        _
    $region12: #{se_forward.2} parent=5 // pred_fallthru
      _
    %p188 = scmp.lt.s32.totalorder %s11, 2
    // Predicated region
    $region29: #{se_forward.2} parent=5 // pred_check
      %p189 = pneg %p188
    $region30: #{se_forward.2} parent=5 // pred_check_branch
      %191 = sbr.rel (%p189) target = $region32
    $region31: #{se_forward.2} parent=5 // pred_region
      // Predicated region
      $region33: #{se_forward.2} parent=31 // pred_check
        %p192 = pneg %p45
      $region34: #{se_forward.2} parent=31 // pred_check_branch
        %194 = sbr.rel (%p192) target = $region36
      $region35: #{se_forward.2} parent=31 // pred_region
        %s195 = smul.u32 2, %s19
        %p196 = scmp.lt.s32.totalorder %s18, 1
        %s197 = scalar_select %p196, %s18, 1
        %p198 = scmp.lt.s32.totalorder %s195, 1
        %s199 = scalar_select %p198, %s195, 1
        %s200 = smul.addr %s197, 2
        %s201 = sadd.s32 %s199, %s200
        %s202 = smul.addr %s201, 4
        %s203 = scalar_lea.vmem %s0, %s202
        %s204 = smul.u32 2, %s19
      $region36: #{se_forward.2} parent=31 // pred_fallthru
        _
    $region32: #{se_forward.2} parent=5 // pred_fallthru
      _
    %p205 = scmp.le.s32.totalorder 1, %s11
    %p206 = scmp.lt.s32.totalorder %s11, 3
    %p207 = pnand %p205, %p206
    %p208 = pneg %p207
    // Predicated region
    $region37: #{se_forward.2} parent=5 // pred_check
      _
    $region38: #{se_forward.2} parent=5 // pred_check_branch
      %210 = sbr.rel (%p207) target = $region40
    $region39: #{se_forward.2} parent=5 // pred_region
      %s211 = ssub.s32 %s11, 1
      %s212 = smul.u32 2, %s21
      %p213 = scmp.lt.s32.totalorder %s20, 1
      %s214 = scalar_select %p213, %s20, 1
      %p215 = scmp.lt.s32.totalorder %s212, 1
      %s216 = scalar_select %p215, %s212, 1
      %s217 = smul.addr %s214, 2
      %s218 = sadd.s32 %s216, %s217
      %s219 = smul.addr %s218, 4
      %s220 = scalar_lea.vmem %s0, %s219
      %p221 = pneg %p51
      %p222 = pneg %p48
      %p223 = pneg %p72
      %p224 = pneg %p69
      %p225 = pneg %p93
      %p226 = pneg %p90
      %p227 = pneg %p114
      %p228 = pneg %p111
      %p229 = pneg %p135
      %p230 = pneg %p132
      %p231 = pneg %p161
      %p232 = pneg %p158
      %p233 = scmp.lt.s32.totalorder %s20, 1
      %s234 = scalar_select %p233, %s20, 1
      %s235 = smul.addr %s234, 4
      %s236 = scalar_lea.vmem %s5, %s235
      %s237 = smul.u32 2, %s21
      %p238 = scmp.lt.s32.totalorder %s20, 1
      %s239 = scalar_select %p238, %s20, 1
      %p240 = scmp.lt.s32.totalorder %s237, 1
      %s241 = scalar_select %p240, %s237, 1
      %s242 = smul.addr %s239, 2
      %s243 = sadd.s32 %s241, %s242
      %s244 = smul.addr %s243, 4
      %s245 = scalar_lea.vmem %s0, %s244
      %s246 = smul.u32 2, %s21
      %p247 = scmp.lt.s32.totalorder %s20, 1
      %s248 = scalar_select %p247, %s20, 1
      %s249 = smul.addr %s248, 4
      %s250 = scalar_lea.vmem %s5, %s249
      %p251 = scmp.eq.s32.totalorder %s21, 0
      // Predicated region
      $region41: #{se_forward.2} parent=39 // pred_check
        %p252 = pneg %p251
      $region42: #{se_forward.2} parent=39 // pred_check_branch
        %254 = sbr.rel (%p252) target = $region44
      $region43: #{se_forward.2} parent=39 // pred_region
        %vm255 = vcmask 3072
        %256 = vst.msk [vmem:[#allocation2] sm:$0xf] %vm255, 0.0
      $region44: #{se_forward.2} parent=39 // pred_fallthru
        _
      %v257 = vld [vmem:[#allocation2] sm:$0xf]
      %v258 = vld [vmem:[%s245] sm:$0xff]
      %v260 = vcombine.high %v258, %v258
      %vm262 = vcmask 1043456
      %v263 = vsel %vm262, %v258, 0.0
      %v264 = vsel %vm262, %v260, 0.0
      %v265 = vadd.f32 %v263, %v264
      %266 = vadd.xlane.f32.xlu0 %v265
      %v267 = vpop.xlane.xlu0 %266
      %v268 = vadd.f32 %v257, %v267
      %vm269 = vcmask 3072
      %270 = vst.msk [vmem:[#allocation2] sm:$0xf] %vm269, %v268
      // Predicated region
      $region45: #{se_forward.2} parent=39 // pred_check
        %p271 = pneg %p251
      $region46: #{se_forward.2} parent=39 // pred_check_branch
        %273 = sbr.rel (%p271) target = $region48
      $region47: #{se_forward.2} parent=39 // pred_region
        %v274 = vld [vmem:[#allocation2] sm:$0xf]
        %v275 = vmul.f32 %v274, 0.00390625
        %v276 = vld [vmem:[%s1] sm:$0xf]
        %v277 = vld [vmem:[%s2] sm:$0xf]
        %vm278 = vcmask 31744
        %v280 = vsel %vm278, %v276, 0
        %v283 = vsel %vm262, %v275, 0
        %285 = vmatprep.subr.mxu0 0.0
        %286 = vmatpush1.msra.mxu0 0.0
        %287 = vmatprep.subr.mxu0 0.0
        %288 = vmatpush1.msra.mxu0 0.0
        %289 = vmatprep.subr.mxu0 0.0
        %290 = vmatpush1.msra.mxu0 0.0
        %291 = vmatprep.subr.mxu0 0.0
        %292 = vmatpush1.msra.mxu0 0.0
        %293 = vmatprep.subr.mxu0 0.0
        %294 = vmatpush1.msra.mxu0 0.0
        %295 = vmatprep.subr.mxu0 0.0
        %296 = vmatpush1.msra.mxu0 0.0
        %297 = vmatprep.subr.mxu0 0.0
        %298 = vmatpush1.msra.mxu0 0.0
        %299 = vmatprep.subr.mxu0 0.0
        %300 = vmatpush1.msra.mxu0 0.0
        %301 = vmatprep.subr.mxu0 0.0
        %302 = vmatpush1.msra.mxu0 0.0
        %303 = vmatprep.subr.mxu0 0.0
        %304 = vmatpush1.msra.mxu0 0.0
        %305 = vmatprep.subr.mxu0 0.0
        %306 = vmatpush1.msra.mxu0 0.0
        %307 = vmatprep.subr.mxu0 0.0
        %308 = vmatpush1.msra.mxu0 0.0
        %309 = vmatprep.subr.mxu0 0.0
        %310 = vmatpush1.msra.mxu0 0.0
        %311 = vmatprep.subr.mxu0 0.0
        %312 = vmatpush1.msra.mxu0 0.0
        %313 = vmatprep.subr.mxu0 0.0
        %314 = vmatpush1.msra.mxu0 0.0
        %315 = vmatprep.subr.mxu0 0.0
        %316 = vmatpush1.msra.mxu0 %v283
        %317 = vmatprep.subr.mxu0 0.0
        %318 = vmatpush2.msra.mxu0 0.0
        %319 = vmatprep.subr.mxu0 0.0
        %320 = vmatpush2.msra.mxu0 0.0
        %321 = vmatprep.subr.mxu0 0.0
        %322 = vmatpush2.msra.mxu0 0.0
        %323 = vmatprep.subr.mxu0 0.0
        %324 = vmatpush2.msra.mxu0 0.0
        %325 = vmatprep.subr.mxu0 0.0
        %326 = vmatpush2.msra.mxu0 0.0
        %327 = vmatprep.subr.mxu0 0.0
        %328 = vmatpush2.msra.mxu0 0.0
        %329 = vmatprep.subr.mxu0 0.0
        %330 = vmatpush2.msra.mxu0 0.0
        %331 = vmatprep.subr.mxu0 0.0
        %332 = vmatpush2.msra.mxu0 0.0
        %333 = vmatprep.subr.mxu0 0.0
        %334 = vmatpush2.msra.mxu0 0.0
        %335 = vmatprep.subr.mxu0 0.0
        %336 = vmatpush2.msra.mxu0 0.0
        %337 = vmatprep.subr.mxu0 0.0
        %338 = vmatpush2.msra.mxu0 0.0
        %339 = vmatprep.subr.mxu0 0.0
        %340 = vmatpush2.msra.mxu0 0.0
        %341 = vmatprep.subr.mxu0 0.0
        %342 = vmatpush2.msra.mxu0 0.0
        %343 = vmatprep.subr.mxu0 0.0
        %344 = vmatpush2.msra.mxu0 0.0
        %345 = vmatprep.subr.mxu0 0.0
        %346 = vmatpush2.msra.mxu0 0.0
        %347 = vmatprep.subr.mxu0 0.0
        %348 = vmatpush2.msra.mxu0 0.0
        %349 = vmatprep.mubr.f32.mxu0 0.0
        %350 = vmatmul.mubr.f32.gmra.mxu0 %v280
        %v351 = vpop.f32.mrf.mxu0
        %v352 = vadd.f32 %v277, %v351
        %v353 = vpop.f32.mrf.mxu0
        %354 = vdwg.mxu0
        %v355 = vmax.f32 %v352, 0.0
        %v356 = vld [vmem:[%s3] sm:$0xf]
        %v357 = vld [vmem:[%s4] sm:$0xf]
        %v359 = vsel %vm278, %v356, 0
        %v362 = vsel %vm262, %v355, 0
        %364 = vmatprep.subr.mxu0 0.0
        %365 = vmatpush1.msra.mxu0 0.0
        %366 = vmatprep.subr.mxu0 0.0
        %367 = vmatpush1.msra.mxu0 0.0
        %368 = vmatprep.subr.mxu0 0.0
        %369 = vmatpush1.msra.mxu0 0.0
        %370 = vmatprep.subr.mxu0 0.0
        %371 = vmatpush1.msra.mxu0 0.0
        %372 = vmatprep.subr.mxu0 0.0
        %373 = vmatpush1.msra.mxu0 0.0
        %374 = vmatprep.subr.mxu0 0.0
        %375 = vmatpush1.msra.mxu0 0.0
        %376 = vmatprep.subr.mxu0 0.0
        %377 = vmatpush1.msra.mxu0 0.0
        %378 = vmatprep.subr.mxu0 0.0
        %379 = vmatpush1.msra.mxu0 0.0
        %380 = vmatprep.subr.mxu0 0.0
        %381 = vmatpush1.msra.mxu0 0.0
        %382 = vmatprep.subr.mxu0 0.0
        %383 = vmatpush1.msra.mxu0 0.0
        %384 = vmatprep.subr.mxu0 0.0
        %385 = vmatpush1.msra.mxu0 0.0
        %386 = vmatprep.subr.mxu0 0.0
        %387 = vmatpush1.msra.mxu0 0.0
        %388 = vmatprep.subr.mxu0 0.0
        %389 = vmatpush1.msra.mxu0 0.0
        %390 = vmatprep.subr.mxu0 0.0
        %391 = vmatpush1.msra.mxu0 0.0
        %392 = vmatprep.subr.mxu0 0.0
        %393 = vmatpush1.msra.mxu0 0.0
        %394 = vmatprep.subr.mxu0 0.0
        %395 = vmatpush1.msra.mxu0 %v362
        %396 = vmatprep.subr.mxu0 0.0
        %397 = vmatpush2.msra.mxu0 0.0
        %398 = vmatprep.subr.mxu0 0.0
        %399 = vmatpush2.msra.mxu0 0.0
        %400 = vmatprep.subr.mxu0 0.0
        %401 = vmatpush2.msra.mxu0 0.0
        %402 = vmatprep.subr.mxu0 0.0
        %403 = vmatpush2.msra.mxu0 0.0
        %404 = vmatprep.subr.mxu0 0.0
        %405 = vmatpush2.msra.mxu0 0.0
        %406 = vmatprep.subr.mxu0 0.0
        %407 = vmatpush2.msra.mxu0 0.0
        %408 = vmatprep.subr.mxu0 0.0
        %409 = vmatpush2.msra.mxu0 0.0
        %410 = vmatprep.subr.mxu0 0.0
        %411 = vmatpush2.msra.mxu0 0.0
        %412 = vmatprep.subr.mxu0 0.0
        %413 = vmatpush2.msra.mxu0 0.0
        %414 = vmatprep.subr.mxu0 0.0
        %415 = vmatpush2.msra.mxu0 0.0
        %416 = vmatprep.subr.mxu0 0.0
        %417 = vmatpush2.msra.mxu0 0.0
        %418 = vmatprep.subr.mxu0 0.0
        %419 = vmatpush2.msra.mxu0 0.0
        %420 = vmatprep.subr.mxu0 0.0
        %421 = vmatpush2.msra.mxu0 0.0
        %422 = vmatprep.subr.mxu0 0.0
        %423 = vmatpush2.msra.mxu0 0.0
        %424 = vmatprep.subr.mxu0 0.0
        %425 = vmatpush2.msra.mxu0 0.0
        %426 = vmatprep.subr.mxu0 0.0
        %427 = vmatpush2.msra.mxu0 0.0
        %428 = vmatprep.mubr.f32.mxu0 0.0
        %429 = vmatmul.mubr.f32.gmra.mxu0 %v359
        %v430 = vpop.f32.mrf.mxu0
        %v431 = vadd.f32 %v357, %v430
        %v432 = vpop.f32.mrf.mxu0
        %433 = vdwg.mxu0
        %v434 = vsub.f32 0.0, %v431
        %v435 = vmul.f32 %v434, 1.442695
        %v436 = vpow.pop %v435
        %v437 = vadd.f32 %v436, 1.0
        %v438 = vrcp.pop %v437
        %v439 = vmul.f32 1.0, %v438
        %440 = vst.msk [vmem:[%s250] sm:$0xf] %vm269, %v439
      $region48: #{se_forward.2} parent=39 // pred_fallthru
        _
      %p441 = scmp.lt.s32.totalorder %s20, 1
      %s442 = scalar_select %p441, %s20, 1
      %s443 = smul.addr %s442, 4
      %s444 = scalar_lea.vmem %s5, %s443
      // Predicated region
      $region49: #{se_forward.2} parent=39 // pred_check
        %p445 = pneg %p158
      $region50: #{se_forward.2} parent=39 // pred_check_branch
        %447 = sbr.rel (%p445) target = $region52
      $region51: #{se_forward.2} parent=39 // pred_region
        _
      $region52: #{se_forward.2} parent=39 // pred_fallthru
        _
    $region40: #{se_forward.2} parent=5 // pred_fallthru
      _
    %p448 = scmp.le.s32.totalorder 2, %s11
    // Predicated region
    $region53: #{se_forward.2} parent=5 // pred_check
      %p449 = pneg %p448
    $region54: #{se_forward.2} parent=5 // pred_check_branch
      %451 = sbr.rel (%p449) target = $region56
    $region55: #{se_forward.2} parent=5 // pred_region
      %s452 = ssub.s32 %s11, 2
      // Predicated region
      $region57: #{se_forward.2} parent=55 // pred_check
        %p453 = pneg %p164
      $region58: #{se_forward.2} parent=55 // pred_check_branch
        %455 = sbr.rel (%p453) target = $region60
      $region59: #{se_forward.2} parent=55 // pred_region
        %p456 = scmp.lt.s32.totalorder %s22, 1
        %s457 = scalar_select %p456, %s22, 1
        %s458 = smul.addr %s457, 4
        %s459 = scalar_lea.vmem %s5, %s458
      $region60: #{se_forward.2} parent=55 // pred_fallthru
        _
    $region56: #{se_forward.2} parent=5 // pred_fallthru
      _
  $region6: #{se_forward.2} parent=0 // loop_footer
    %s15 = sadd.s32 1, %s11
  $region7: #{se_forward.2} parent=0 // loop_footer_branch
    %10 = sbr.rel target = $region3
  $region8: #{se_forward.2} parent=0 // loop_exit
    _

</llo_original>
